<compile_context>
chip_gen: v6e
topology: v6e:2x2x1
jax: 0.10.0
libtpu: 0.0.40
codegen_flags: <defaults>
</compile_context>

<pallas_src>
import functools

import jax
import jax.numpy as jnp
from jax.experimental import pallas as pl
from jax.experimental.pallas import tpu as pltpu


_TARGET_BLOCK_BYTES = 2 * 1024 * 1024   # ~2 MiB input block: near HBM roofline
_VMEM_BUDGET_BYTES = 16 * 1024 * 1024   # double-buffered in+out budget, safe on all parts


def _choose_tile(n_rows, row_width, in_itemsize, out_itemsize):
    """Row-tile size: big enough to hide the ~0.35us per-grid-step overhead,
    small enough that double-buffered in+out blocks fit a conservative VMEM
    budget, and leaving >= 2 grid steps so a v7x megacore can split work."""
    if n_rows < 8:
        return n_rows  # block must equal the full (short) array dim
    bytes_per_row_in = row_width * in_itemsize
    bytes_per_row_io = row_width * (in_itemsize + out_itemsize) * 2  # x2: double buffer
    tile = min(
        n_rows,
        max(8, _TARGET_BLOCK_BYTES // bytes_per_row_in),
        max(8, _VMEM_BUDGET_BYTES // bytes_per_row_io),
    )
    # Prefer at least two grid steps (v7x has 2 TensorCores per chip).
    half = (n_rows // 2) // 8 * 8
    if half >= 8:
        tile = min(tile, half)
    return max(8, (tile // 8) * 8)


def _segment_allreduce_sum(x, seg):
    """All-reduce (sum) within contiguous, aligned lane segments of width `seg`
    (a power of two that divides the lane width).  Hypercube butterfly:
    log2(seg) steps of two XLU rolls + a VPU select/add; every lane of a
    segment ends up holding the segment's sum.  Exact f32 additions."""
    width = x.shape[-1]
    lane = jax.lax.broadcasted_iota(jnp.int32, x.shape, dimension=x.ndim - 1)
    step = 1
    while step < seg:
        fwd = pltpu.roll(x, shift=width - step, axis=x.ndim - 1)  # lane i -> x[i + step]
        bwd = pltpu.roll(x, shift=step, axis=x.ndim - 1)          # lane i -> x[i - step]
        x = x + jnp.where((lane & step) == 0, fwd, bwd)
        step *= 2
    return x


def _layernorm_kernel(x_ref, w_ref, b_ref, o_ref, *, eps, seg):
    # x_ref: (tile, row_width); w_ref / b_ref: (1, row_width)
    x = x_ref[...].astype(jnp.float32)
    w = w_ref[...].astype(jnp.float32)
    b = b_ref[...].astype(jnp.float32)

    if seg is None:
        # Full-row (lane-axis) reduction: the row width is the channel dim C.
        inv_c = 1.0 / x.shape[-1]
        mean = jnp.sum(x, axis=-1, keepdims=True) * inv_c
        centered = x - mean
        var = jnp.sum(centered * centered, axis=-1, keepdims=True) * inv_c
    else:
        # Lane-dense packing: each 128-lane row holds 128 // seg independent
        # channel vectors of width `seg`; reduce within aligned lane segments.
        inv_c = 1.0 / seg
        mean = _segment_allreduce_sum(x, seg) * inv_c
        centered = x - mean
        var = _segment_allreduce_sum(centered * centered, seg) * inv_c

    # Two-pass (centered) biased variance + eps inside rsqrt, matching
    # torch.nn.functional.layer_norm; all math in f32.
    inv = jax.lax.rsqrt(var + eps)
    y = centered * inv * w + b
    o_ref[...] = y.astype(o_ref.dtype)


def layer_norm_channel_last(x, weight, bias, eps=1e-6):
    """x: (B, H, W, C) channels-last.  weight/bias: (C,).  Same shape/dtype out."""
    B, H, W, C = x.shape
    N = B * H * W
    out_dtype = x.dtype

    # Lane packing decision: make the lane axis a dense multiple of 128.
    seg = None
    k = 1
    if C < 128 and (C & (C - 1)) == 0 and 128 % C == 0 and N % (128 // C) == 0:
        k = 128 // C
        seg = C

    row_width = C * k
    n_rows = N // k

    x2 = x.reshape(n_rows, row_width)                     # free, row-major reshape
    if k > 1:
        w2 = jnp.tile(weight.reshape(1, C), (1, k))       # (1, 128): weight per segment
        b2 = jnp.tile(bias.reshape(1, C), (1, k))
    else:
        w2 = weight.reshape(1, C)
        b2 = bias.reshape(1, C)

    in_itemsize = x.dtype.itemsize
    out_itemsize = jnp.dtype(out_dtype).itemsize
    tile = _choose_tile(n_rows, row_width, in_itemsize, out_itemsize)
    grid = pl.cdiv(n_rows, tile)                          # ragged last block is clipped

    kernel = functools.partial(_layernorm_kernel, eps=float(eps), seg=seg)

    cost = pl.CostEstimate(
        flops=8 * N * C,
        transcendentals=N,
        bytes_accessed=N * C * (in_itemsize + out_itemsize) + 2 * C * weight.dtype.itemsize,
    )

    out = pl.pallas_call(
        kernel,
        out_shape=jax.ShapeDtypeStruct((n_rows, row_width), out_dtype),
        grid_spec=pltpu.PrefetchScalarGridSpec(
            num_scalar_prefetch=0,
            grid=(grid,),
            in_specs=[
                pl.BlockSpec((tile, row_width), lambda i: (i, 0)),
                pl.BlockSpec((1, row_width), lambda i: (0, 0)),
                pl.BlockSpec((1, row_width), lambda i: (0, 0)),
            ],
            out_specs=pl.BlockSpec((tile, row_width), lambda i: (i, 0)),
        ),
        compiler_params=pltpu.CompilerParams(
            dimension_semantics=("parallel",),
            vmem_limit_bytes=32 * 1024 * 1024,
        ),
        cost_estimate=cost,
    )(x2, w2, b2)

    return out.reshape(B, H, W, C)


if __name__ == "__main__":
    # Small channels-last shapes consistent with the module: (B, H, W, C).
    B, H, W, C = 2, 16, 16, 32
    key = jax.random.PRNGKey(0)
    kx, kw, kb = jax.random.split(key, 3)
    x = jax.random.normal(kx, (B, H, W, C), dtype=jnp.float32)
    # Non-trivial (but deterministic) affine params to exercise scale/shift.
    weight = 1.0 + 0.1 * jax.random.normal(kw, (C,), dtype=jnp.float32)
    bias = 0.1 * jax.random.normal(kb, (C,), dtype=jnp.float32)

    y = layer_norm_channel_last(x, weight, bias, eps=1e-6)
    y = jax.block_until_ready(y)

    # Reference: plain-JAX layer norm (matches torch.nn.functional.layer_norm).
    xm = x - jnp.mean(x, axis=-1, keepdims=True)
    ref = xm / jnp.sqrt(jnp.mean(xm * xm, axis=-1, keepdims=True) + 1e-6)
    ref = ref * weight + bias

    assert y.shape == x.shape and y.dtype == x.dtype
    assert jnp.max(jnp.abs(y - ref)) < 1e-5

    print("KERNEL_OK")
</pallas_src>

<mosaic_0001>
module attributes {stable_mosaic.version = 11 : i64} {
  func.func @_layernorm_kernel(%arg0: i32, %arg1: memref<64x128xf32, #tpu.memory_space<vmem>>, %arg2: memref<1x128xf32, #tpu.memory_space<vmem>>, %arg3: memref<1x128xf32, #tpu.memory_space<vmem>>, %arg4: memref<64x128xf32, #tpu.memory_space<vmem>>) attributes {dimension_semantics = [#tpu.dimension_semantics<parallel>], iteration_bounds = array<i64: 2>, scalar_prefetch = 0 : i64, scratch_operands = 0 : i64, tpu.core_type = #tpu.core_type<tc>, window_params = [{transform_indices = @transform_0, window_bounds = array<i64: 64, 128>}, {pipeline_mode = #tpu.pipeline_mode<synchronous>, transform_indices = @transform_1, window_bounds = array<i64: 1, 128>}, {pipeline_mode = #tpu.pipeline_mode<synchronous>, transform_indices = @transform_2, window_bounds = array<i64: 1, 128>}, {transform_indices = @transform_3, window_bounds = array<i64: 64, 128>}]} {
    %c0 = arith.constant 0 : index
    %c0_0 = arith.constant 0 : index
    %0 = vector.load %arg1[%c0, %c0_0] : memref<64x128xf32, #tpu.memory_space<vmem>>, vector<64x128xf32>
    %c0_1 = arith.constant 0 : index
    %c0_2 = arith.constant 0 : index
    %1 = vector.load %arg2[%c0_1, %c0_2] : memref<1x128xf32, #tpu.memory_space<vmem>>, vector<1x128xf32>
    %c0_3 = arith.constant 0 : index
    %c0_4 = arith.constant 0 : index
    %2 = vector.load %arg3[%c0_3, %c0_4] : memref<1x128xf32, #tpu.memory_space<vmem>>, vector<1x128xf32>
    %3 = tpu.iota {dimensions = array<i32: 1>} : vector<64x128xi32>
    %c127_i32 = arith.constant 127 : i32
    %4 = tpu.dynamic_rotate %0 by %c127_i32 dim 1 : vector<64x128xf32>, i32 -> vector<64x128xf32>
    %c1_i32 = arith.constant 1 : i32
    %5 = tpu.dynamic_rotate %0 by %c1_i32 dim 1 : vector<64x128xf32>, i32 -> vector<64x128xf32>
    %c1_i32_5 = arith.constant 1 : i32
    %6 = vector.broadcast %c1_i32_5 : i32 to vector<64x128xi32>
    %7 = arith.andi %3, %6 : vector<64x128xi32>
    %c0_i32 = arith.constant 0 : i32
    %8 = vector.broadcast %c0_i32 : i32 to vector<64x128xi32>
    %9 = arith.cmpi eq, %7, %8 : vector<64x128xi32>
    %10 = arith.select %9, %4, %5 : vector<64x128xi1>, vector<64x128xf32>
    %11 = arith.addf %0, %10 : vector<64x128xf32>
    %c126_i32 = arith.constant 126 : i32
    %12 = tpu.dynamic_rotate %11 by %c126_i32 dim 1 : vector<64x128xf32>, i32 -> vector<64x128xf32>
    %c2_i32 = arith.constant 2 : i32
    %13 = tpu.dynamic_rotate %11 by %c2_i32 dim 1 : vector<64x128xf32>, i32 -> vector<64x128xf32>
    %c2_i32_6 = arith.constant 2 : i32
    %14 = vector.broadcast %c2_i32_6 : i32 to vector<64x128xi32>
    %15 = arith.andi %3, %14 : vector<64x128xi32>
    %c0_i32_7 = arith.constant 0 : i32
    %16 = vector.broadcast %c0_i32_7 : i32 to vector<64x128xi32>
    %17 = arith.cmpi eq, %15, %16 : vector<64x128xi32>
    %18 = arith.select %17, %12, %13 : vector<64x128xi1>, vector<64x128xf32>
    %19 = arith.addf %11, %18 : vector<64x128xf32>
    %c124_i32 = arith.constant 124 : i32
    %20 = tpu.dynamic_rotate %19 by %c124_i32 dim 1 : vector<64x128xf32>, i32 -> vector<64x128xf32>
    %c4_i32 = arith.constant 4 : i32
    %21 = tpu.dynamic_rotate %19 by %c4_i32 dim 1 : vector<64x128xf32>, i32 -> vector<64x128xf32>
    %c4_i32_8 = arith.constant 4 : i32
    %22 = vector.broadcast %c4_i32_8 : i32 to vector<64x128xi32>
    %23 = arith.andi %3, %22 : vector<64x128xi32>
    %c0_i32_9 = arith.constant 0 : i32
    %24 = vector.broadcast %c0_i32_9 : i32 to vector<64x128xi32>
    %25 = arith.cmpi eq, %23, %24 : vector<64x128xi32>
    %26 = arith.select %25, %20, %21 : vector<64x128xi1>, vector<64x128xf32>
    %27 = arith.addf %19, %26 : vector<64x128xf32>
    %c120_i32 = arith.constant 120 : i32
    %28 = tpu.dynamic_rotate %27 by %c120_i32 dim 1 : vector<64x128xf32>, i32 -> vector<64x128xf32>
    %c8_i32 = arith.constant 8 : i32
    %29 = tpu.dynamic_rotate %27 by %c8_i32 dim 1 : vector<64x128xf32>, i32 -> vector<64x128xf32>
    %c8_i32_10 = arith.constant 8 : i32
    %30 = vector.broadcast %c8_i32_10 : i32 to vector<64x128xi32>
    %31 = arith.andi %3, %30 : vector<64x128xi32>
    %c0_i32_11 = arith.constant 0 : i32
    %32 = vector.broadcast %c0_i32_11 : i32 to vector<64x128xi32>
    %33 = arith.cmpi eq, %31, %32 : vector<64x128xi32>
    %34 = arith.select %33, %28, %29 : vector<64x128xi1>, vector<64x128xf32>
    %35 = arith.addf %27, %34 : vector<64x128xf32>
    %c112_i32 = arith.constant 112 : i32
    %36 = tpu.dynamic_rotate %35 by %c112_i32 dim 1 : vector<64x128xf32>, i32 -> vector<64x128xf32>
    %c16_i32 = arith.constant 16 : i32
    %37 = tpu.dynamic_rotate %35 by %c16_i32 dim 1 : vector<64x128xf32>, i32 -> vector<64x128xf32>
    %c16_i32_12 = arith.constant 16 : i32
    %38 = vector.broadcast %c16_i32_12 : i32 to vector<64x128xi32>
    %39 = arith.andi %3, %38 : vector<64x128xi32>
    %c0_i32_13 = arith.constant 0 : i32
    %40 = vector.broadcast %c0_i32_13 : i32 to vector<64x128xi32>
    %41 = arith.cmpi eq, %39, %40 : vector<64x128xi32>
    %42 = arith.select %41, %36, %37 : vector<64x128xi1>, vector<64x128xf32>
    %43 = arith.addf %35, %42 : vector<64x128xf32>
    %cst = arith.constant 3.125000e-02 : f32
    %44 = vector.broadcast %cst : f32 to vector<64x128xf32>
    %45 = arith.mulf %43, %44 : vector<64x128xf32>
    %46 = arith.subf %0, %45 : vector<64x128xf32>
    %47 = arith.mulf %46, %46 : vector<64x128xf32>
    %48 = tpu.iota {dimensions = array<i32: 1>} : vector<64x128xi32>
    %c127_i32_14 = arith.constant 127 : i32
    %49 = tpu.dynamic_rotate %47 by %c127_i32_14 dim 1 : vector<64x128xf32>, i32 -> vector<64x128xf32>
    %c1_i32_15 = arith.constant 1 : i32
    %50 = tpu.dynamic_rotate %47 by %c1_i32_15 dim 1 : vector<64x128xf32>, i32 -> vector<64x128xf32>
    %c1_i32_16 = arith.constant 1 : i32
    %51 = vector.broadcast %c1_i32_16 : i32 to vector<64x128xi32>
    %52 = arith.andi %48, %51 : vector<64x128xi32>
    %c0_i32_17 = arith.constant 0 : i32
    %53 = vector.broadcast %c0_i32_17 : i32 to vector<64x128xi32>
    %54 = arith.cmpi eq, %52, %53 : vector<64x128xi32>
    %55 = arith.select %54, %49, %50 : vector<64x128xi1>, vector<64x128xf32>
    %56 = arith.addf %47, %55 : vector<64x128xf32>
    %c126_i32_18 = arith.constant 126 : i32
    %57 = tpu.dynamic_rotate %56 by %c126_i32_18 dim 1 : vector<64x128xf32>, i32 -> vector<64x128xf32>
    %c2_i32_19 = arith.constant 2 : i32
    %58 = tpu.dynamic_rotate %56 by %c2_i32_19 dim 1 : vector<64x128xf32>, i32 -> vector<64x128xf32>
    %c2_i32_20 = arith.constant 2 : i32
    %59 = vector.broadcast %c2_i32_20 : i32 to vector<64x128xi32>
    %60 = arith.andi %48, %59 : vector<64x128xi32>
    %c0_i32_21 = arith.constant 0 : i32
    %61 = vector.broadcast %c0_i32_21 : i32 to vector<64x128xi32>
    %62 = arith.cmpi eq, %60, %61 : vector<64x128xi32>
    %63 = arith.select %62, %57, %58 : vector<64x128xi1>, vector<64x128xf32>
    %64 = arith.addf %56, %63 : vector<64x128xf32>
    %c124_i32_22 = arith.constant 124 : i32
    %65 = tpu.dynamic_rotate %64 by %c124_i32_22 dim 1 : vector<64x128xf32>, i32 -> vector<64x128xf32>
    %c4_i32_23 = arith.constant 4 : i32
    %66 = tpu.dynamic_rotate %64 by %c4_i32_23 dim 1 : vector<64x128xf32>, i32 -> vector<64x128xf32>
    %c4_i32_24 = arith.constant 4 : i32
    %67 = vector.broadcast %c4_i32_24 : i32 to vector<64x128xi32>
    %68 = arith.andi %48, %67 : vector<64x128xi32>
    %c0_i32_25 = arith.constant 0 : i32
    %69 = vector.broadcast %c0_i32_25 : i32 to vector<64x128xi32>
    %70 = arith.cmpi eq, %68, %69 : vector<64x128xi32>
    %71 = arith.select %70, %65, %66 : vector<64x128xi1>, vector<64x128xf32>
    %72 = arith.addf %64, %71 : vector<64x128xf32>
    %c120_i32_26 = arith.constant 120 : i32
    %73 = tpu.dynamic_rotate %72 by %c120_i32_26 dim 1 : vector<64x128xf32>, i32 -> vector<64x128xf32>
    %c8_i32_27 = arith.constant 8 : i32
    %74 = tpu.dynamic_rotate %72 by %c8_i32_27 dim 1 : vector<64x128xf32>, i32 -> vector<64x128xf32>
    %c8_i32_28 = arith.constant 8 : i32
    %75 = vector.broadcast %c8_i32_28 : i32 to vector<64x128xi32>
    %76 = arith.andi %48, %75 : vector<64x128xi32>
    %c0_i32_29 = arith.constant 0 : i32
    %77 = vector.broadcast %c0_i32_29 : i32 to vector<64x128xi32>
    %78 = arith.cmpi eq, %76, %77 : vector<64x128xi32>
    %79 = arith.select %78, %73, %74 : vector<64x128xi1>, vector<64x128xf32>
    %80 = arith.addf %72, %79 : vector<64x128xf32>
    %c112_i32_30 = arith.constant 112 : i32
    %81 = tpu.dynamic_rotate %80 by %c112_i32_30 dim 1 : vector<64x128xf32>, i32 -> vector<64x128xf32>
    %c16_i32_31 = arith.constant 16 : i32
    %82 = tpu.dynamic_rotate %80 by %c16_i32_31 dim 1 : vector<64x128xf32>, i32 -> vector<64x128xf32>
    %c16_i32_32 = arith.constant 16 : i32
    %83 = vector.broadcast %c16_i32_32 : i32 to vector<64x128xi32>
    %84 = arith.andi %48, %83 : vector<64x128xi32>
    %c0_i32_33 = arith.constant 0 : i32
    %85 = vector.broadcast %c0_i32_33 : i32 to vector<64x128xi32>
    %86 = arith.cmpi eq, %84, %85 : vector<64x128xi32>
    %87 = arith.select %86, %81, %82 : vector<64x128xi1>, vector<64x128xf32>
    %88 = arith.addf %80, %87 : vector<64x128xf32>
    %cst_34 = arith.constant 3.125000e-02 : f32
    %89 = vector.broadcast %cst_34 : f32 to vector<64x128xf32>
    %90 = arith.mulf %88, %89 : vector<64x128xf32>
    %cst_35 = arith.constant 9.99999997E-7 : f32
    %91 = vector.broadcast %cst_35 : f32 to vector<64x128xf32>
    %92 = arith.addf %90, %91 : vector<64x128xf32>
    %93 = math.rsqrt %92 : vector<64x128xf32>
    %94 = arith.mulf %46, %93 : vector<64x128xf32>
    %95 = vector.broadcast %1 : vector<1x128xf32> to vector<64x128xf32>
    %96 = arith.mulf %94, %95 : vector<64x128xf32>
    %97 = vector.broadcast %2 : vector<1x128xf32> to vector<64x128xf32>
    %98 = arith.addf %96, %97 : vector<64x128xf32>
    %c0_36 = arith.constant 0 : index
    %c0_37 = arith.constant 0 : index
    %99 = vector.load %arg4[%c0_36, %c0_37] : memref<64x128xf32, #tpu.memory_space<vmem>>, vector<64x128xf32>
    tpu.vector_store %arg4[%c0_36, %c0_37], %98 {strides = array<i32>} : memref<64x128xf32, #tpu.memory_space<vmem>>, vector<64x128xf32>,
    return
  }
  func.func @transform_0(%arg0: i32) -> (i32, i32) {
    %c0_i32 = arith.constant 0 : i32
    %c0_i32_0 = arith.constant 0 : i32
    return %arg0, %c0_i32 : i32, i32
  }
  func.func @transform_1(%arg0: i32) -> (i32, i32) {
    %c0_i32 = arith.constant 0 : i32
    %c0_i32_0 = arith.constant 0 : i32
    %c0_i32_1 = arith.constant 0 : i32
    return %c0_i32, %c0_i32_0 : i32, i32
  }
  func.func @transform_2(%arg0: i32) -> (i32, i32) {
    %c0_i32 = arith.constant 0 : i32
    %c0_i32_0 = arith.constant 0 : i32
    %c0_i32_1 = arith.constant 0 : i32
    return %c0_i32, %c0_i32_0 : i32, i32
  }
  func.func @transform_3(%arg0: i32) -> (i32, i32) {
    %c0_i32 = arith.constant 0 : i32
    %c0_i32_0 = arith.constant 0 : i32
    return %arg0, %c0_i32 : i32, i32
  }
}

</mosaic_0001>

<llo_original>
// kernel: tpu_custom_call.1
$region0: #{tpu_custom_call.1}
  #allocation0 [shape = 'u32[]', space=smem, size = 0x4, offset = 0x4, fixed_abs, tag = 'smem constant byte address 0x4 - core index']
  #allocation1 [shape = 'u32[144,128]{1,0:T(1,128)}', space=vmem, size = 0x12000, scoped, tag = 'internal scratch']
  %s0 = inlined_call_operand.hbm [shape: f32[128,128], index: 0, kind: input, shape index: {}]
  %s1 = inlined_call_operand.vmem [shape: f32[1,128], index: 1, kind: input, shape index: {}]
  %s2 = inlined_call_operand.vmem [shape: f32[1,128], index: 2, kind: input, shape index: {}]
  %s3 = inlined_call_operand.hbm [shape: f32[128,128], index: 3, kind: output, shape index: {}]
  %s4 = sld [smem:[#allocation0]]
  $region49: #{tpu_custom_call.1} parent=0
    _
  %s6 = ssub.s32 1, %s4
  %s7 = scalar_select 0, %s6, %s4
  $region1: #{tpu_custom_call.1} parent=0
    #allocation2 [shape = 'u8[65536]{0}', space=vmem, size = 0x10000, scoped, tag = 'input window, operand 0']
    #allocation3 [shape = 's32[2]{0}', space=sflag, size = 0x8, scoped, tag = 'scoped memory for tpu_custom_call.1']
    #allocation4 [shape = 's32[2]{0}', space=sflag, size = 0x8, scoped, tag = 'scoped memory for tpu_custom_call.1']
    #allocation5 [shape = 'u8[65536]{0}', space=vmem, size = 0x10000, scoped, tag = 'output window, operand 0']
    %8 = vsyncpa [#allocation3], 0
    %s9 = scalar_lea.sflag [#allocation3], 1
    %10 = vsyncpa %s9, 0
    %11 = vsyncpa [#allocation4], 0
    %s12 = scalar_lea.sflag [#allocation4], 1
    %13 = vsyncpa %s12, 0
    loop: start=0, step=1, limit=4
    $region2: #{tpu_custom_call.1} parent=1 // loop_pre_header
      _
    $region3: #{tpu_custom_call.1} parent=1 // loop_header
      %s15 = sphi 0, %s19
      %p16 = scmp.ge.s32.totalorder %s15, 4
      %s25 = sphi 0, %s27
      %s28 = sphi 0, %s25
      %s29 = sphi 0, %s28
      %s45 = sphi 0, %s29
      %s49 = sphi 0, %s49
      %s51 = sphi 0, %s49
      %s52 = sphi 0, %s51
      %s66 = sphi 0, %s52
      %s70 = sphi 0, %s70
      %s72 = sphi 0, %s70
      %s73 = sphi 0, %s72
      %s87 = sphi 0, %s73
      %s93 = sphi 0, %s95
      %s96 = sphi 0, %s93
      %s97 = sphi 0, %s96
      %s113 = sphi 0, %s97
    $region4: #{tpu_custom_call.1} parent=1 // loop_header_branch
      %18 = sbr.rel (%p16) target = $region8
    $region5: #{tpu_custom_call.1} parent=1 // loop_body
      %s20 = ssub.s32 %s15, 1
      %s21 = ssub.s32 %s15, 2
      %s22 = sadd.s32 %s15, 1
      %s23 = ssub.s32 %s15, %s22
      %p24 = scmp.eq.s32.totalorder %s23, 0
      %s26 = sadd.s32 %s25, 1
      %s27 = scalar_select %p24, %s25, %s26
      %p30 = pneg %p24
      %p31 = scmp.eq.s32.totalorder %s15, 1
      %p32 = por %p30, %p31
      %p33 = scmp.ne.s32.totalorder %s25, %s28
      %p34 = scmp.eq.s32.totalorder %s15, 0
      %p35 = por %p33, %p34
      %p36 = scmp.ne.s32.totalorder %s25, %s28
      %p37 = scmp.eq.s32.totalorder %s20, 1
      %p38 = por %p36, %p37
      %p39 = scmp.ne.s32.totalorder %s28, %s29
      %p40 = scmp.eq.s32.totalorder %s20, 0
      %p41 = por %p39, %p40
      %p42 = scmp.ne.s32.totalorder %s28, %s29
      %p43 = scmp.eq.s32.totalorder %s21, 1
      %p44 = por %p42, %p43
      %p46 = scmp.ne.s32.totalorder %s29, %s45
      %p47 = scmp.eq.s32.totalorder %s21, 0
      %p48 = por %p46, %p47
      %s50 = sadd.s32 %s49, 1
      %p53 = scmp.eq.s32.totalorder %s15, 1
      %p54 = scmp.ne.s32.totalorder %s49, %s51
      %p55 = scmp.eq.s32.totalorder %s15, 0
      %p56 = por %p54, %p55
      %p57 = scmp.ne.s32.totalorder %s49, %s51
      %p58 = scmp.eq.s32.totalorder %s20, 1
      %p59 = por %p57, %p58
      %p60 = scmp.ne.s32.totalorder %s51, %s52
      %p61 = scmp.eq.s32.totalorder %s20, 0
      %p62 = por %p60, %p61
      %p63 = scmp.ne.s32.totalorder %s51, %s52
      %p64 = scmp.eq.s32.totalorder %s21, 1
      %p65 = por %p63, %p64
      %p67 = scmp.ne.s32.totalorder %s52, %s66
      %p68 = scmp.eq.s32.totalorder %s21, 0
      %p69 = por %p67, %p68
      %s71 = sadd.s32 %s70, 1
      %p74 = scmp.eq.s32.totalorder %s15, 1
      %p75 = scmp.ne.s32.totalorder %s70, %s72
      %p76 = scmp.eq.s32.totalorder %s15, 0
      %p77 = por %p75, %p76
      %p78 = scmp.ne.s32.totalorder %s70, %s72
      %p79 = scmp.eq.s32.totalorder %s20, 1
      %p80 = por %p78, %p79
      %p81 = scmp.ne.s32.totalorder %s72, %s73
      %p82 = scmp.eq.s32.totalorder %s20, 0
      %p83 = por %p81, %p82
      %p84 = scmp.ne.s32.totalorder %s72, %s73
      %p85 = scmp.eq.s32.totalorder %s21, 1
      %p86 = por %p84, %p85
      %p88 = scmp.ne.s32.totalorder %s73, %s87
      %p89 = scmp.eq.s32.totalorder %s21, 0
      %p90 = por %p88, %p89
      %s91 = ssub.s32 %s15, %s22
      %p92 = scmp.eq.s32.totalorder %s91, 0
      %s94 = sadd.s32 %s93, 1
      %s95 = scalar_select %p92, %s93, %s94
      %p98 = pneg %p92
      %p99 = scmp.eq.s32.totalorder %s15, 1
      %p100 = por %p98, %p99
      %p101 = scmp.ne.s32.totalorder %s93, %s96
      %p102 = scmp.eq.s32.totalorder %s15, 0
      %p103 = por %p101, %p102
      %p104 = scmp.ne.s32.totalorder %s93, %s96
      %p105 = scmp.eq.s32.totalorder %s20, 1
      %p106 = por %p104, %p105
      %p107 = scmp.ne.s32.totalorder %s96, %s97
      %p108 = scmp.eq.s32.totalorder %s20, 0
      %p109 = por %p107, %p108
      %p110 = scmp.ne.s32.totalorder %s96, %s97
      %p111 = scmp.eq.s32.totalorder %s21, 1
      %p112 = por %p110, %p111
      %p114 = scmp.ne.s32.totalorder %s97, %s113
      %p115 = scmp.eq.s32.totalorder %s21, 0
      %p116 = por %p114, %p115
      %p117 = scmp.le.s32.totalorder 1, %s15
      %p118 = scmp.lt.s32.totalorder %s15, 3
      %p119 = pnand %p117, %p118
      %p120 = pneg %p119
      // Predicated region
      $region9: #{tpu_custom_call.1} parent=5 // pred_check
        _
      $region10: #{tpu_custom_call.1} parent=5 // pred_check_branch
        %122 = sbr.rel (%p119) target = $region12
      $region11: #{tpu_custom_call.1} parent=5 // pred_region
        %s123 = ssub.s32 %s15, 1
        // Predicated region
        $region13: #{tpu_custom_call.1} parent=11 // pred_check
          %p124 = pneg %p62
        $region14: #{tpu_custom_call.1} parent=11 // pred_check_branch
          %126 = sbr.rel (%p124) target = $region16
        $region15: #{tpu_custom_call.1} parent=11 // pred_region
          _
        $region16: #{tpu_custom_call.1} parent=11 // pred_fallthru
          _
        // Predicated region
        $region17: #{tpu_custom_call.1} parent=11 // pred_check
          %p127 = pneg %p83
        $region18: #{tpu_custom_call.1} parent=11 // pred_check_branch
          %129 = sbr.rel (%p127) target = $region20
        $region19: #{tpu_custom_call.1} parent=11 // pred_region
          _
        $region20: #{tpu_custom_call.1} parent=11 // pred_fallthru
          _
      $region12: #{tpu_custom_call.1} parent=5 // pred_fallthru
        _
      %p130 = scmp.lt.s32.totalorder %s15, 2
      // Predicated region
      $region21: #{tpu_custom_call.1} parent=5 // pred_check
        %p131 = pneg %p130
      $region22: #{tpu_custom_call.1} parent=5 // pred_check_branch
        %133 = sbr.rel (%p131) target = $region24
      $region23: #{tpu_custom_call.1} parent=5 // pred_region
        // Predicated region
        $region25: #{tpu_custom_call.1} parent=23 // pred_check
          %p134 = pneg %p35
        $region26: #{tpu_custom_call.1} parent=23 // pred_check_branch
          %136 = sbr.rel (%p134) target = $region28
        $region27: #{tpu_custom_call.1} parent=23 // pred_region
          %s137 = sand.u32 %s25, 1
          %s138 = scalar_lea.sflag [#allocation3], %s137
          %s139 = sand.u32 %s25, 1
          %s140 = smul.addr %s139, 64
          %s141 = scalar_lea.vmem [#allocation2], %s140
          %s142 = smul.u32 8, %s15
          %s144 = ssub.s32 1024, 1024
          %145 = vsyncadd %s138, %s144
          %s146 = smul.addr %s142, 128
          %s147 = scalar_lea.hbm %s0, %s146
          %s148 = sshll.u32 %s141, 4
          %s149 = int_to_ptr.vmem [resolvable:$true] %s148
          %154 = dma.hbm_to_vmem [thread:$0]  %s147, 1024, %s149, %s138, 128, 128, 8
        $region28: #{tpu_custom_call.1} parent=23 // pred_fallthru
          _
      $region24: #{tpu_custom_call.1} parent=5 // pred_fallthru
        _
      %p155 = scmp.le.s32.totalorder 1, %s15
      %p156 = scmp.lt.s32.totalorder %s15, 3
      %p157 = pnand %p155, %p156
      %p158 = pneg %p157
      // Predicated region
      $region29: #{tpu_custom_call.1} parent=5 // pred_check
        _
      $region30: #{tpu_custom_call.1} parent=5 // pred_check_branch
        %160 = sbr.rel (%p157) target = $region32
      $region31: #{tpu_custom_call.1} parent=5 // pred_region
        %s161 = ssub.s32 %s15, 1
        %s162 = sand.u32 %s28, 1
        %s163 = scalar_lea.sflag [#allocation3], %s162
        %s164 = sand.u32 %s28, 1
        %s165 = smul.addr %s164, 64
        %s166 = scalar_lea.vmem [#allocation2], %s165
        // Predicated region
        $region33: #{tpu_custom_call.1} parent=31 // pred_check
          %p167 = pneg %p41
        $region34: #{tpu_custom_call.1} parent=31 // pred_check_branch
          %169 = sbr.rel (%p167) target = $region36
        $region35: #{tpu_custom_call.1} parent=31 // pred_region
          %170 = dma.done %s163, 1024
        $region36: #{tpu_custom_call.1} parent=31 // pred_fallthru
          _
        %s171 = sand.u32 %s28, 1
        %s172 = scalar_lea.sflag [#allocation3], %s171
        %s173 = sand.u32 %s28, 1
        %s174 = smul.addr %s173, 64
        %s175 = scalar_lea.vmem [#allocation2], %s174
        %p176 = pneg %p41
        %p177 = pneg %p38
        %p178 = pneg %p62
        %p179 = pneg %p59
        %p180 = pneg %p83
        %p181 = pneg %p80
        %p182 = pneg %p109
        %p183 = pneg %p106
        %s184 = sand.u32 %s96, 1
        %s185 = scalar_lea.sflag [#allocation4], %s184
        %s186 = sand.u32 %s96, 1
        %s187 = smul.addr %s186, 64
        %s188 = scalar_lea.vmem [#allocation5], %s187
        %s189 = smul.u32 8, %s20
        %s190 = smul.u32 8, %s20
        %v191 = vld [vmem:[%s166] sm:$0xff]
        %v192 = vld [vmem:[%s166 + $0x8] sm:$0xff]
        %v193 = vld [vmem:[%s166 + $0x10] sm:$0xff]
        %v194 = vld [vmem:[%s166 + $0x18] sm:$0xff]
        %v195 = vld [vmem:[%s166 + $0x20] sm:$0xff]
        %v196 = vld [vmem:[%s166 + $0x28] sm:$0xff]
        %v197 = vld [vmem:[%s166 + $0x30] sm:$0xff]
        %v198 = vld [vmem:[%s166 + $0x38] sm:$0xff]
        %v199 = vld [vmem:[%s1] sm:$0x1]
        %v200 = vld [vmem:[%s2] sm:$0x1]
        %v201 = vlaneseq
        %v202 = vand.u32 %v201, 127
        %203 = vrot.lane.b32.xlu0 %v191, 127
        %v204 = vpop.permute.xlu0 %203
        %205 = vrot.lane.b32.xlu0 %v192, 127
        %v206 = vpop.permute.xlu0 %205
        %207 = vrot.lane.b32.xlu0 %v193, 127
        %v208 = vpop.permute.xlu0 %207
        %209 = vrot.lane.b32.xlu0 %v194, 127
        %v210 = vpop.permute.xlu0 %209
        %211 = vrot.lane.b32.xlu0 %v195, 127
        %v212 = vpop.permute.xlu0 %211
        %213 = vrot.lane.b32.xlu0 %v196, 127
        %v214 = vpop.permute.xlu0 %213
        %215 = vrot.lane.b32.xlu0 %v197, 127
        %v216 = vpop.permute.xlu0 %215
        %217 = vrot.lane.b32.xlu0 %v198, 127
        %v218 = vpop.permute.xlu0 %217
        %219 = vrot.lane.b32.xlu0 %v191, 1
        %v220 = vpop.permute.xlu0 %219
        %221 = vrot.lane.b32.xlu0 %v192, 1
        %v222 = vpop.permute.xlu0 %221
        %223 = vrot.lane.b32.xlu0 %v193, 1
        %v224 = vpop.permute.xlu0 %223
        %225 = vrot.lane.b32.xlu0 %v194, 1
        %v226 = vpop.permute.xlu0 %225
        %227 = vrot.lane.b32.xlu0 %v195, 1
        %v228 = vpop.permute.xlu0 %227
        %229 = vrot.lane.b32.xlu0 %v196, 1
        %v230 = vpop.permute.xlu0 %229
        %231 = vrot.lane.b32.xlu0 %v197, 1
        %v232 = vpop.permute.xlu0 %231
        %233 = vrot.lane.b32.xlu0 %v198, 1
        %v234 = vpop.permute.xlu0 %233
        %v235 = vand.u32 %v202, 1
        %vm236 = vcmp.eq.s32.totalorder %v235, 0
        %v237 = vsel %vm236, %v204, %v220
        %v238 = vsel %vm236, %v206, %v222
        %v239 = vsel %vm236, %v208, %v224
        %v240 = vsel %vm236, %v210, %v226
        %v241 = vsel %vm236, %v212, %v228
        %v242 = vsel %vm236, %v214, %v230
        %v243 = vsel %vm236, %v216, %v232
        %v244 = vsel %vm236, %v218, %v234
        %v245 = vadd.f32 %v191, %v237
        %v246 = vadd.f32 %v192, %v238
        %v247 = vadd.f32 %v193, %v239
        %v248 = vadd.f32 %v194, %v240
        %v249 = vadd.f32 %v195, %v241
        %v250 = vadd.f32 %v196, %v242
        %v251 = vadd.f32 %v197, %v243
        %v252 = vadd.f32 %v198, %v244
        %253 = vrot.lane.b32.xlu0 %v245, 126
        %v254 = vpop.permute.xlu0 %253
        %255 = vrot.lane.b32.xlu0 %v246, 126
        %v256 = vpop.permute.xlu0 %255
        %257 = vrot.lane.b32.xlu0 %v247, 126
        %v258 = vpop.permute.xlu0 %257
        %259 = vrot.lane.b32.xlu0 %v248, 126
        %v260 = vpop.permute.xlu0 %259
        %261 = vrot.lane.b32.xlu0 %v249, 126
        %v262 = vpop.permute.xlu0 %261
        %263 = vrot.lane.b32.xlu0 %v250, 126
        %v264 = vpop.permute.xlu0 %263
        %265 = vrot.lane.b32.xlu0 %v251, 126
        %v266 = vpop.permute.xlu0 %265
        %267 = vrot.lane.b32.xlu0 %v252, 126
        %v268 = vpop.permute.xlu0 %267
        %269 = vrot.lane.b32.xlu0 %v245, 2
        %v270 = vpop.permute.xlu0 %269
        %271 = vrot.lane.b32.xlu0 %v246, 2
        %v272 = vpop.permute.xlu0 %271
        %273 = vrot.lane.b32.xlu0 %v247, 2
        %v274 = vpop.permute.xlu0 %273
        %275 = vrot.lane.b32.xlu0 %v248, 2
        %v276 = vpop.permute.xlu0 %275
        %277 = vrot.lane.b32.xlu0 %v249, 2
        %v278 = vpop.permute.xlu0 %277
        %279 = vrot.lane.b32.xlu0 %v250, 2
        %v280 = vpop.permute.xlu0 %279
        %281 = vrot.lane.b32.xlu0 %v251, 2
        %v282 = vpop.permute.xlu0 %281
        %283 = vrot.lane.b32.xlu0 %v252, 2
        %v284 = vpop.permute.xlu0 %283
        %v285 = vand.u32 %v202, 2
        %vm286 = vcmp.eq.s32.totalorder %v285, 0
        %v287 = vsel %vm286, %v254, %v270
        %v288 = vsel %vm286, %v256, %v272
        %v289 = vsel %vm286, %v258, %v274
        %v290 = vsel %vm286, %v260, %v276
        %v291 = vsel %vm286, %v262, %v278
        %v292 = vsel %vm286, %v264, %v280
        %v293 = vsel %vm286, %v266, %v282
        %v294 = vsel %vm286, %v268, %v284
        %v295 = vadd.f32 %v245, %v287
        %v296 = vadd.f32 %v246, %v288
        %v297 = vadd.f32 %v247, %v289
        %v298 = vadd.f32 %v248, %v290
        %v299 = vadd.f32 %v249, %v291
        %v300 = vadd.f32 %v250, %v292
        %v301 = vadd.f32 %v251, %v293
        %v302 = vadd.f32 %v252, %v294
        %303 = vrot.lane.b32.xlu0 %v295, 124
        %v304 = vpop.permute.xlu0 %303
        %305 = vrot.lane.b32.xlu0 %v296, 124
        %v306 = vpop.permute.xlu0 %305
        %307 = vrot.lane.b32.xlu0 %v297, 124
        %v308 = vpop.permute.xlu0 %307
        %309 = vrot.lane.b32.xlu0 %v298, 124
        %v310 = vpop.permute.xlu0 %309
        %311 = vrot.lane.b32.xlu0 %v299, 124
        %v312 = vpop.permute.xlu0 %311
        %313 = vrot.lane.b32.xlu0 %v300, 124
        %v314 = vpop.permute.xlu0 %313
        %315 = vrot.lane.b32.xlu0 %v301, 124
        %v316 = vpop.permute.xlu0 %315
        %317 = vrot.lane.b32.xlu0 %v302, 124
        %v318 = vpop.permute.xlu0 %317
        %319 = vrot.lane.b32.xlu0 %v295, 4
        %v320 = vpop.permute.xlu0 %319
        %321 = vrot.lane.b32.xlu0 %v296, 4
        %v322 = vpop.permute.xlu0 %321
        %323 = vrot.lane.b32.xlu0 %v297, 4
        %v324 = vpop.permute.xlu0 %323
        %325 = vrot.lane.b32.xlu0 %v298, 4
        %v326 = vpop.permute.xlu0 %325
        %327 = vrot.lane.b32.xlu0 %v299, 4
        %v328 = vpop.permute.xlu0 %327
        %329 = vrot.lane.b32.xlu0 %v300, 4
        %v330 = vpop.permute.xlu0 %329
        %331 = vrot.lane.b32.xlu0 %v301, 4
        %v332 = vpop.permute.xlu0 %331
        %333 = vrot.lane.b32.xlu0 %v302, 4
        %v334 = vpop.permute.xlu0 %333
        %v335 = vand.u32 %v202, 4
        %vm336 = vcmp.eq.s32.totalorder %v335, 0
        %v337 = vsel %vm336, %v304, %v320
        %v338 = vsel %vm336, %v306, %v322
        %v339 = vsel %vm336, %v308, %v324
        %v340 = vsel %vm336, %v310, %v326
        %v341 = vsel %vm336, %v312, %v328
        %v342 = vsel %vm336, %v314, %v330
        %v343 = vsel %vm336, %v316, %v332
        %v344 = vsel %vm336, %v318, %v334
        %v345 = vadd.f32 %v295, %v337
        %v346 = vadd.f32 %v296, %v338
        %v347 = vadd.f32 %v297, %v339
        %v348 = vadd.f32 %v298, %v340
        %v349 = vadd.f32 %v299, %v341
        %v350 = vadd.f32 %v300, %v342
        %v351 = vadd.f32 %v301, %v343
        %v352 = vadd.f32 %v302, %v344
        %353 = vrot.lane.b32.xlu0 %v345, 120
        %v354 = vpop.permute.xlu0 %353
        %355 = vrot.lane.b32.xlu0 %v346, 120
        %v356 = vpop.permute.xlu0 %355
        %357 = vrot.lane.b32.xlu0 %v347, 120
        %v358 = vpop.permute.xlu0 %357
        %359 = vrot.lane.b32.xlu0 %v348, 120
        %v360 = vpop.permute.xlu0 %359
        %361 = vrot.lane.b32.xlu0 %v349, 120
        %v362 = vpop.permute.xlu0 %361
        %363 = vrot.lane.b32.xlu0 %v350, 120
        %v364 = vpop.permute.xlu0 %363
        %365 = vrot.lane.b32.xlu0 %v351, 120
        %v366 = vpop.permute.xlu0 %365
        %367 = vrot.lane.b32.xlu0 %v352, 120
        %v368 = vpop.permute.xlu0 %367
        %369 = vrot.lane.b32.xlu0 %v345, 8
        %v370 = vpop.permute.xlu0 %369
        %371 = vrot.lane.b32.xlu0 %v346, 8
        %v372 = vpop.permute.xlu0 %371
        %373 = vrot.lane.b32.xlu0 %v347, 8
        %v374 = vpop.permute.xlu0 %373
        %375 = vrot.lane.b32.xlu0 %v348, 8
        %v376 = vpop.permute.xlu0 %375
        %377 = vrot.lane.b32.xlu0 %v349, 8
        %v378 = vpop.permute.xlu0 %377
        %379 = vrot.lane.b32.xlu0 %v350, 8
        %v380 = vpop.permute.xlu0 %379
        %381 = vrot.lane.b32.xlu0 %v351, 8
        %v382 = vpop.permute.xlu0 %381
        %383 = vrot.lane.b32.xlu0 %v352, 8
        %v384 = vpop.permute.xlu0 %383
        %v385 = vand.u32 %v202, 8
        %vm386 = vcmp.eq.s32.totalorder %v385, 0
        %v387 = vsel %vm386, %v354, %v370
        %v388 = vsel %vm386, %v356, %v372
        %v389 = vsel %vm386, %v358, %v374
        %v390 = vsel %vm386, %v360, %v376
        %v391 = vsel %vm386, %v362, %v378
        %v392 = vsel %vm386, %v364, %v380
        %v393 = vsel %vm386, %v366, %v382
        %v394 = vsel %vm386, %v368, %v384
        %v395 = vadd.f32 %v345, %v387
        %v396 = vadd.f32 %v346, %v388
        %v397 = vadd.f32 %v347, %v389
        %v398 = vadd.f32 %v348, %v390
        %v399 = vadd.f32 %v349, %v391
        %v400 = vadd.f32 %v350, %v392
        %v401 = vadd.f32 %v351, %v393
        %v402 = vadd.f32 %v352, %v394
        %403 = vrot.lane.b32.xlu0 %v395, 112
        %v404 = vpop.permute.xlu0 %403
        %405 = vrot.lane.b32.xlu0 %v396, 112
        %v406 = vpop.permute.xlu0 %405
        %407 = vrot.lane.b32.xlu0 %v397, 112
        %v408 = vpop.permute.xlu0 %407
        %409 = vrot.lane.b32.xlu0 %v398, 112
        %v410 = vpop.permute.xlu0 %409
        %411 = vrot.lane.b32.xlu0 %v399, 112
        %v412 = vpop.permute.xlu0 %411
        %413 = vrot.lane.b32.xlu0 %v400, 112
        %v414 = vpop.permute.xlu0 %413
        %415 = vrot.lane.b32.xlu0 %v401, 112
        %v416 = vpop.permute.xlu0 %415
        %417 = vrot.lane.b32.xlu0 %v402, 112
        %v418 = vpop.permute.xlu0 %417
        %419 = vrot.lane.b32.xlu0 %v395, 16
        %v420 = vpop.permute.xlu0 %419
        %421 = vrot.lane.b32.xlu0 %v396, 16
        %v422 = vpop.permute.xlu0 %421
        %423 = vrot.lane.b32.xlu0 %v397, 16
        %v424 = vpop.permute.xlu0 %423
        %425 = vrot.lane.b32.xlu0 %v398, 16
        %v426 = vpop.permute.xlu0 %425
        %427 = vrot.lane.b32.xlu0 %v399, 16
        %v428 = vpop.permute.xlu0 %427
        %429 = vrot.lane.b32.xlu0 %v400, 16
        %v430 = vpop.permute.xlu0 %429
        %431 = vrot.lane.b32.xlu0 %v401, 16
        %v432 = vpop.permute.xlu0 %431
        %433 = vrot.lane.b32.xlu0 %v402, 16
        %v434 = vpop.permute.xlu0 %433
        %v435 = vand.u32 %v202, 16
        %vm436 = vcmp.eq.s32.totalorder %v435, 0
        %v437 = vsel %vm436, %v404, %v420
        %v438 = vsel %vm436, %v406, %v422
        %v439 = vsel %vm436, %v408, %v424
        %v440 = vsel %vm436, %v410, %v426
        %v441 = vsel %vm436, %v412, %v428
        %v442 = vsel %vm436, %v414, %v430
        %v443 = vsel %vm436, %v416, %v432
        %v444 = vsel %vm436, %v418, %v434
        %v445 = vadd.f32 %v395, %v437
        %v446 = vadd.f32 %v396, %v438
        %v447 = vadd.f32 %v397, %v439
        %v448 = vadd.f32 %v398, %v440
        %v449 = vadd.f32 %v399, %v441
        %v450 = vadd.f32 %v400, %v442
        %v451 = vadd.f32 %v401, %v443
        %v452 = vadd.f32 %v402, %v444
        %v453 = vmul.f32 %v445, 0.03125
        %v454 = vmul.f32 %v446, 0.03125
        %v455 = vmul.f32 %v447, 0.03125
        %v456 = vmul.f32 %v448, 0.03125
        %v457 = vmul.f32 %v449, 0.03125
        %v458 = vmul.f32 %v450, 0.03125
        %v459 = vmul.f32 %v451, 0.03125
        %v460 = vmul.f32 %v452, 0.03125
        %v461 = vsub.f32 %v191, %v453
        %v462 = vsub.f32 %v192, %v454
        %v463 = vsub.f32 %v193, %v455
        %v464 = vsub.f32 %v194, %v456
        %v465 = vsub.f32 %v195, %v457
        %v466 = vsub.f32 %v196, %v458
        %v467 = vsub.f32 %v197, %v459
        %v468 = vsub.f32 %v198, %v460
        %v469 = vmul.f32 %v461, %v461
        %v470 = vmul.f32 %v462, %v462
        %v471 = vmul.f32 %v463, %v463
        %v472 = vmul.f32 %v464, %v464
        %v473 = vmul.f32 %v465, %v465
        %v474 = vmul.f32 %v466, %v466
        %v475 = vmul.f32 %v467, %v467
        %v476 = vmul.f32 %v468, %v468
        %477 = vrot.lane.b32.xlu0 %v469, 127
        %v478 = vpop.permute.xlu0 %477
        %479 = vrot.lane.b32.xlu0 %v470, 127
        %v480 = vpop.permute.xlu0 %479
        %481 = vrot.lane.b32.xlu0 %v471, 127
        %v482 = vpop.permute.xlu0 %481
        %483 = vrot.lane.b32.xlu0 %v472, 127
        %v484 = vpop.permute.xlu0 %483
        %485 = vrot.lane.b32.xlu0 %v473, 127
        %v486 = vpop.permute.xlu0 %485
        %487 = vrot.lane.b32.xlu0 %v474, 127
        %v488 = vpop.permute.xlu0 %487
        %489 = vrot.lane.b32.xlu0 %v475, 127
        %v490 = vpop.permute.xlu0 %489
        %491 = vrot.lane.b32.xlu0 %v476, 127
        %v492 = vpop.permute.xlu0 %491
        %493 = vrot.lane.b32.xlu0 %v469, 1
        %v494 = vpop.permute.xlu0 %493
        %495 = vrot.lane.b32.xlu0 %v470, 1
        %v496 = vpop.permute.xlu0 %495
        %497 = vrot.lane.b32.xlu0 %v471, 1
        %v498 = vpop.permute.xlu0 %497
        %499 = vrot.lane.b32.xlu0 %v472, 1
        %v500 = vpop.permute.xlu0 %499
        %501 = vrot.lane.b32.xlu0 %v473, 1
        %v502 = vpop.permute.xlu0 %501
        %503 = vrot.lane.b32.xlu0 %v474, 1
        %v504 = vpop.permute.xlu0 %503
        %505 = vrot.lane.b32.xlu0 %v475, 1
        %v506 = vpop.permute.xlu0 %505
        %507 = vrot.lane.b32.xlu0 %v476, 1
        %v508 = vpop.permute.xlu0 %507
        %v509 = vsel %vm236, %v478, %v494
        %v510 = vsel %vm236, %v480, %v496
        %v511 = vsel %vm236, %v482, %v498
        %v512 = vsel %vm236, %v484, %v500
        %v513 = vsel %vm236, %v486, %v502
        %v514 = vsel %vm236, %v488, %v504
        %v515 = vsel %vm236, %v490, %v506
        %v516 = vsel %vm236, %v492, %v508
        %v517 = vadd.f32 %v469, %v509
        %v518 = vadd.f32 %v470, %v510
        %v519 = vadd.f32 %v471, %v511
        %v520 = vadd.f32 %v472, %v512
        %v521 = vadd.f32 %v473, %v513
        %v522 = vadd.f32 %v474, %v514
        %v523 = vadd.f32 %v475, %v515
        %v524 = vadd.f32 %v476, %v516
        %525 = vrot.lane.b32.xlu0 %v517, 126
        %v526 = vpop.permute.xlu0 %525
        %527 = vrot.lane.b32.xlu0 %v518, 126
        %v528 = vpop.permute.xlu0 %527
        %529 = vrot.lane.b32.xlu0 %v519, 126
        %v530 = vpop.permute.xlu0 %529
        %531 = vrot.lane.b32.xlu0 %v520, 126
        %v532 = vpop.permute.xlu0 %531
        %533 = vrot.lane.b32.xlu0 %v521, 126
        %v534 = vpop.permute.xlu0 %533
        %535 = vrot.lane.b32.xlu0 %v522, 126
        %v536 = vpop.permute.xlu0 %535
        %537 = vrot.lane.b32.xlu0 %v523, 126
        %v538 = vpop.permute.xlu0 %537
        %539 = vrot.lane.b32.xlu0 %v524, 126
        %v540 = vpop.permute.xlu0 %539
        %541 = vrot.lane.b32.xlu0 %v517, 2
        %v542 = vpop.permute.xlu0 %541
        %543 = vrot.lane.b32.xlu0 %v518, 2
        %v544 = vpop.permute.xlu0 %543
        %545 = vrot.lane.b32.xlu0 %v519, 2
        %v546 = vpop.permute.xlu0 %545
        %547 = vrot.lane.b32.xlu0 %v520, 2
        %v548 = vpop.permute.xlu0 %547
        %549 = vrot.lane.b32.xlu0 %v521, 2
        %v550 = vpop.permute.xlu0 %549
        %551 = vrot.lane.b32.xlu0 %v522, 2
        %v552 = vpop.permute.xlu0 %551
        %553 = vrot.lane.b32.xlu0 %v523, 2
        %v554 = vpop.permute.xlu0 %553
        %555 = vrot.lane.b32.xlu0 %v524, 2
        %v556 = vpop.permute.xlu0 %555
        %v557 = vsel %vm286, %v526, %v542
        %v558 = vsel %vm286, %v528, %v544
        %v559 = vsel %vm286, %v530, %v546
        %v560 = vsel %vm286, %v532, %v548
        %v561 = vsel %vm286, %v534, %v550
        %v562 = vsel %vm286, %v536, %v552
        %v563 = vsel %vm286, %v538, %v554
        %v564 = vsel %vm286, %v540, %v556
        %v565 = vadd.f32 %v517, %v557
        %v566 = vadd.f32 %v518, %v558
        %v567 = vadd.f32 %v519, %v559
        %v568 = vadd.f32 %v520, %v560
        %v569 = vadd.f32 %v521, %v561
        %v570 = vadd.f32 %v522, %v562
        %v571 = vadd.f32 %v523, %v563
        %v572 = vadd.f32 %v524, %v564
        %573 = vrot.lane.b32.xlu0 %v565, 124
        %v574 = vpop.permute.xlu0 %573
        %575 = vrot.lane.b32.xlu0 %v566, 124
        %v576 = vpop.permute.xlu0 %575
        %577 = vrot.lane.b32.xlu0 %v567, 124
        %v578 = vpop.permute.xlu0 %577
        %579 = vrot.lane.b32.xlu0 %v568, 124
        %v580 = vpop.permute.xlu0 %579
        %581 = vrot.lane.b32.xlu0 %v569, 124
        %v582 = vpop.permute.xlu0 %581
        %583 = vrot.lane.b32.xlu0 %v570, 124
        %v584 = vpop.permute.xlu0 %583
        %585 = vrot.lane.b32.xlu0 %v571, 124
        %v586 = vpop.permute.xlu0 %585
        %587 = vrot.lane.b32.xlu0 %v572, 124
        %v588 = vpop.permute.xlu0 %587
        %589 = vrot.lane.b32.xlu0 %v565, 4
        %v590 = vpop.permute.xlu0 %589
        %591 = vrot.lane.b32.xlu0 %v566, 4
        %v592 = vpop.permute.xlu0 %591
        %593 = vrot.lane.b32.xlu0 %v567, 4
        %v594 = vpop.permute.xlu0 %593
        %595 = vrot.lane.b32.xlu0 %v568, 4
        %v596 = vpop.permute.xlu0 %595
        %597 = vrot.lane.b32.xlu0 %v569, 4
        %v598 = vpop.permute.xlu0 %597
        %599 = vrot.lane.b32.xlu0 %v570, 4
        %v600 = vpop.permute.xlu0 %599
        %601 = vrot.lane.b32.xlu0 %v571, 4
        %v602 = vpop.permute.xlu0 %601
        %603 = vrot.lane.b32.xlu0 %v572, 4
        %v604 = vpop.permute.xlu0 %603
        %v605 = vsel %vm336, %v574, %v590
        %v606 = vsel %vm336, %v576, %v592
        %v607 = vsel %vm336, %v578, %v594
        %v608 = vsel %vm336, %v580, %v596
        %v609 = vsel %vm336, %v582, %v598
        %v610 = vsel %vm336, %v584, %v600
        %v611 = vsel %vm336, %v586, %v602
        %v612 = vsel %vm336, %v588, %v604
        %v613 = vadd.f32 %v565, %v605
        %v614 = vadd.f32 %v566, %v606
        %v615 = vadd.f32 %v567, %v607
        %v616 = vadd.f32 %v568, %v608
        %v617 = vadd.f32 %v569, %v609
        %v618 = vadd.f32 %v570, %v610
        %v619 = vadd.f32 %v571, %v611
        %v620 = vadd.f32 %v572, %v612
        %621 = vrot.lane.b32.xlu0 %v613, 120
        %v622 = vpop.permute.xlu0 %621
        %623 = vrot.lane.b32.xlu0 %v614, 120
        %v624 = vpop.permute.xlu0 %623
        %625 = vrot.lane.b32.xlu0 %v615, 120
        %v626 = vpop.permute.xlu0 %625
        %627 = vrot.lane.b32.xlu0 %v616, 120
        %v628 = vpop.permute.xlu0 %627
        %629 = vrot.lane.b32.xlu0 %v617, 120
        %v630 = vpop.permute.xlu0 %629
        %631 = vrot.lane.b32.xlu0 %v618, 120
        %v632 = vpop.permute.xlu0 %631
        %633 = vrot.lane.b32.xlu0 %v619, 120
        %v634 = vpop.permute.xlu0 %633
        %635 = vrot.lane.b32.xlu0 %v620, 120
        %v636 = vpop.permute.xlu0 %635
        %637 = vrot.lane.b32.xlu0 %v613, 8
        %v638 = vpop.permute.xlu0 %637
        %639 = vrot.lane.b32.xlu0 %v614, 8
        %v640 = vpop.permute.xlu0 %639
        %641 = vrot.lane.b32.xlu0 %v615, 8
        %v642 = vpop.permute.xlu0 %641
        %643 = vrot.lane.b32.xlu0 %v616, 8
        %v644 = vpop.permute.xlu0 %643
        %645 = vrot.lane.b32.xlu0 %v617, 8
        %v646 = vpop.permute.xlu0 %645
        %647 = vrot.lane.b32.xlu0 %v618, 8
        %v648 = vpop.permute.xlu0 %647
        %649 = vrot.lane.b32.xlu0 %v619, 8
        %v650 = vpop.permute.xlu0 %649
        %651 = vrot.lane.b32.xlu0 %v620, 8
        %v652 = vpop.permute.xlu0 %651
        %v653 = vsel %vm386, %v622, %v638
        %v654 = vsel %vm386, %v624, %v640
        %v655 = vsel %vm386, %v626, %v642
        %v656 = vsel %vm386, %v628, %v644
        %v657 = vsel %vm386, %v630, %v646
        %v658 = vsel %vm386, %v632, %v648
        %v659 = vsel %vm386, %v634, %v650
        %v660 = vsel %vm386, %v636, %v652
        %v661 = vadd.f32 %v613, %v653
        %v662 = vadd.f32 %v614, %v654
        %v663 = vadd.f32 %v615, %v655
        %v664 = vadd.f32 %v616, %v656
        %v665 = vadd.f32 %v617, %v657
        %v666 = vadd.f32 %v618, %v658
        %v667 = vadd.f32 %v619, %v659
        %v668 = vadd.f32 %v620, %v660
        %669 = vrot.lane.b32.xlu0 %v661, 112
        %v670 = vpop.permute.xlu0 %669
        %671 = vrot.lane.b32.xlu0 %v662, 112
        %v672 = vpop.permute.xlu0 %671
        %673 = vrot.lane.b32.xlu0 %v663, 112
        %v674 = vpop.permute.xlu0 %673
        %675 = vrot.lane.b32.xlu0 %v664, 112
        %v676 = vpop.permute.xlu0 %675
        %677 = vrot.lane.b32.xlu0 %v665, 112
        %v678 = vpop.permute.xlu0 %677
        %679 = vrot.lane.b32.xlu0 %v666, 112
        %v680 = vpop.permute.xlu0 %679
        %681 = vrot.lane.b32.xlu0 %v667, 112
        %v682 = vpop.permute.xlu0 %681
        %683 = vrot.lane.b32.xlu0 %v668, 112
        %v684 = vpop.permute.xlu0 %683
        %685 = vrot.lane.b32.xlu0 %v661, 16
        %v686 = vpop.permute.xlu0 %685
        %687 = vrot.lane.b32.xlu0 %v662, 16
        %v688 = vpop.permute.xlu0 %687
        %689 = vrot.lane.b32.xlu0 %v663, 16
        %v690 = vpop.permute.xlu0 %689
        %691 = vrot.lane.b32.xlu0 %v664, 16
        %v692 = vpop.permute.xlu0 %691
        %693 = vrot.lane.b32.xlu0 %v665, 16
        %v694 = vpop.permute.xlu0 %693
        %695 = vrot.lane.b32.xlu0 %v666, 16
        %v696 = vpop.permute.xlu0 %695
        %697 = vrot.lane.b32.xlu0 %v667, 16
        %v698 = vpop.permute.xlu0 %697
        %699 = vrot.lane.b32.xlu0 %v668, 16
        %v700 = vpop.permute.xlu0 %699
        %v701 = vsel %vm436, %v670, %v686
        %v702 = vsel %vm436, %v672, %v688
        %v703 = vsel %vm436, %v674, %v690
        %v704 = vsel %vm436, %v676, %v692
        %v705 = vsel %vm436, %v678, %v694
        %v706 = vsel %vm436, %v680, %v696
        %v707 = vsel %vm436, %v682, %v698
        %v708 = vsel %vm436, %v684, %v700
        %v709 = vadd.f32 %v661, %v701
        %v710 = vadd.f32 %v662, %v702
        %v711 = vadd.f32 %v663, %v703
        %v712 = vadd.f32 %v664, %v704
        %v713 = vadd.f32 %v665, %v705
        %v714 = vadd.f32 %v666, %v706
        %v715 = vadd.f32 %v667, %v707
        %v716 = vadd.f32 %v668, %v708
        %v717 = vmul.f32 %v709, 0.03125
        %v718 = vmul.f32 %v710, 0.03125
        %v719 = vmul.f32 %v711, 0.03125
        %v720 = vmul.f32 %v712, 0.03125
        %v721 = vmul.f32 %v713, 0.03125
        %v722 = vmul.f32 %v714, 0.03125
        %v723 = vmul.f32 %v715, 0.03125
        %v724 = vmul.f32 %v716, 0.03125
        %v725 = vadd.f32 %v717, 1e-06
        %v726 = vadd.f32 %v718, 1e-06
        %v727 = vadd.f32 %v719, 1e-06
        %v728 = vadd.f32 %v720, 1e-06
        %v729 = vadd.f32 %v721, 1e-06
        %v730 = vadd.f32 %v722, 1e-06
        %v731 = vadd.f32 %v723, 1e-06
        %v732 = vadd.f32 %v724, 1e-06
        %v733 = vrsqrt.pop %v725
        %v734 = vrsqrt.pop %v726
        %v735 = vrsqrt.pop %v727
        %v736 = vrsqrt.pop %v728
        %v737 = vrsqrt.pop %v729
        %v738 = vrsqrt.pop %v730
        %v739 = vrsqrt.pop %v731
        %v740 = vrsqrt.pop %v732
        %v741 = vmul.f32 %v461, %v733
        %v742 = vmul.f32 %v462, %v734
        %v743 = vmul.f32 %v463, %v735
        %v744 = vmul.f32 %v464, %v736
        %v745 = vmul.f32 %v465, %v737
        %v746 = vmul.f32 %v466, %v738
        %v747 = vmul.f32 %v467, %v739
        %v748 = vmul.f32 %v468, %v740
        %v750 = vlaneseq
        %v751 = vshrl.u32 %v750, 7
        %v752 = vsub.s32 0, %v751
        %v753 = vrot.slane %v199, %v752
        %v755 = vmul.f32 %v741, %v753
        %v756 = vmul.f32 %v742, %v753
        %v757 = vmul.f32 %v743, %v753
        %v758 = vmul.f32 %v744, %v753
        %v759 = vmul.f32 %v745, %v753
        %v760 = vmul.f32 %v746, %v753
        %v761 = vmul.f32 %v747, %v753
        %v762 = vmul.f32 %v748, %v753
        %v764 = vlaneseq
        %v765 = vshrl.u32 %v764, 7
        %v766 = vsub.s32 0, %v765
        %v767 = vrot.slane %v200, %v766
        %v769 = vadd.f32 %v755, %v767
        %v770 = vadd.f32 %v756, %v767
        %v771 = vadd.f32 %v757, %v767
        %v772 = vadd.f32 %v758, %v767
        %v773 = vadd.f32 %v759, %v767
        %v774 = vadd.f32 %v760, %v767
        %v775 = vadd.f32 %v761, %v767
        %v776 = vadd.f32 %v762, %v767
        %777 = vst [vmem:[%s188] sm:$0xff] %v769
        %778 = vst [vmem:[%s188 + $0x8] sm:$0xff] %v770
        %779 = vst [vmem:[%s188 + $0x10] sm:$0xff] %v771
        %780 = vst [vmem:[%s188 + $0x18] sm:$0xff] %v772
        %781 = vst [vmem:[%s188 + $0x20] sm:$0xff] %v773
        %782 = vst [vmem:[%s188 + $0x28] sm:$0xff] %v774
        %783 = vst [vmem:[%s188 + $0x30] sm:$0xff] %v775
        %784 = vst [vmem:[%s188 + $0x38] sm:$0xff] %v776
        %s785 = sand.u32 %s96, 1
        %s786 = scalar_lea.sflag [#allocation4], %s785
        %s787 = sand.u32 %s96, 1
        %s788 = smul.addr %s787, 64
        %s789 = scalar_lea.vmem [#allocation5], %s788
        // Predicated region
        $region37: #{tpu_custom_call.1} parent=31 // pred_check
          %p790 = pneg %p106
        $region38: #{tpu_custom_call.1} parent=31 // pred_check_branch
          %792 = sbr.rel (%p790) target = $region40
        $region39: #{tpu_custom_call.1} parent=31 // pred_region
          %s793 = smul.u32 8, %s20
          %s795 = ssub.s32 1024, 1024
          %796 = vsyncadd %s786, %s795
          %s797 = smul.addr %s793, 128
          %s798 = scalar_lea.hbm %s3, %s797
          %s799 = sshll.u32 %s789, 4
          %s800 = int_to_ptr.vmem [resolvable:$true] %s799
          %805 = dma.vmem_to_hbm [thread:$0]  %s800, 1024, %s798, %s786, 128, 128, 8
        $region40: #{tpu_custom_call.1} parent=31 // pred_fallthru
          _
      $region32: #{tpu_custom_call.1} parent=5 // pred_fallthru
        _
      %p806 = scmp.le.s32.totalorder 2, %s15
      // Predicated region
      $region41: #{tpu_custom_call.1} parent=5 // pred_check
        %p807 = pneg %p806
      $region42: #{tpu_custom_call.1} parent=5 // pred_check_branch
        %809 = sbr.rel (%p807) target = $region44
      $region43: #{tpu_custom_call.1} parent=5 // pred_region
        %s810 = ssub.s32 %s15, 2
        // Predicated region
        $region45: #{tpu_custom_call.1} parent=43 // pred_check
          %p811 = pneg %p112
        $region46: #{tpu_custom_call.1} parent=43 // pred_check_branch
          %813 = sbr.rel (%p811) target = $region48
        $region47: #{tpu_custom_call.1} parent=43 // pred_region
          %s814 = sand.u32 %s97, 1
          %s815 = scalar_lea.sflag [#allocation4], %s814
          %s816 = sand.u32 %s97, 1
          %s817 = smul.addr %s816, 64
          %s818 = scalar_lea.vmem [#allocation5], %s817
          %819 = dma.done %s815, 1024
        $region48: #{tpu_custom_call.1} parent=43 // pred_fallthru
          _
      $region44: #{tpu_custom_call.1} parent=5 // pred_fallthru
        _
    $region6: #{tpu_custom_call.1} parent=1 // loop_footer
      %s19 = sadd.s32 1, %s15
    $region7: #{tpu_custom_call.1} parent=1 // loop_footer_branch
      %14 = sbr.rel target = $region3
    $region8: #{tpu_custom_call.1} parent=1 // loop_exit
      _
    %820 = vsyncpa [#allocation3], 1
    %s821 = scalar_lea.sflag [#allocation3], 1
    %822 = vsyncpa %s821, 1
    %823 = vsyncpa [#allocation4], 1
    %s824 = scalar_lea.sflag [#allocation4], 1
    %825 = vsyncpa %s824, 1

</llo_original>
